<compile_context>
chip_gen: v7x
topology: tpu7x:2x2x1
jax: 0.10.0
libtpu: 0.0.40
codegen_flags: <defaults>
</compile_context>

<pallas_src>
import functools

import jax
import jax.numpy as jnp
from jax.experimental import pallas as pl
from jax.experimental.pallas import tpu as pltpu


def _round_up(n, m):
    return (n + m - 1) // m * m


def rnn_fused_kernel(x_ref, w_ih_t_ref, bias_h_ref, w_fc_t_ref, b_fc_ref, out_ref):
    # Single-step RNN cell with h0 == 0:  h1 = tanh(x @ W_ih^T + (b_ih + b_hh)).
    # x arrives in f32 (no separate HBM cast pass); cast to bf16 under the DMA.
    x_bf = x_ref[...].astype(jnp.bfloat16)
    pre = jnp.dot(x_bf, w_ih_t_ref[...],
                  preferred_element_type=jnp.float32)            # bf16 MXU, f32 acc
    h1 = jnp.tanh(pre + bias_h_ref[...])                         # f32 elementwise (v5e-safe)
    r = jnp.maximum(h1, 0.0)                                     # ReLU in f32
    out = jnp.dot(r.astype(jnp.bfloat16), w_fc_t_ref[...],
                  preferred_element_type=jnp.float32) + b_fc_ref[...]
    out_ref[...] = out.astype(out_ref.dtype)


def prepare_params(w_ih, b_ih, w_hh, b_hh, w_fc, b_fc):
    """One-time weight prep (transpose / cast / bias fold).

    Keep this OUT of the per-call path so each forward pays only the pallas_call,
    not extra XLA transpose/cast kernels plus an HBM round-trip of the weights.
    """
    # h0 == 0 and seq_len == 1 in the reference forward => h0 @ W_hh^T == 0.
    del w_hh
    bias_h = (b_ih + b_hh).astype(jnp.float32).reshape(1, -1)    # (1, H) folded RNN bias
    w_ih_t = w_ih.T.astype(jnp.bfloat16)                         # (I, H) MXU operand
    w_fc_t = w_fc.T.astype(jnp.bfloat16)                         # (H, O) MXU operand
    b_fc_row = b_fc.astype(jnp.float32).reshape(1, -1)           # (1, O)
    return (w_ih_t, bias_h, w_fc_t, b_fc_row)


@functools.partial(jax.jit, static_argnames=("block_b",))
def rnn_forward(x, params, *, block_b=512):
    """x: (B, input_size) float32; params from prepare_params(). Returns (B, O) f32."""
    w_ih_t, bias_h, w_fc_t, b_fc_row = params
    B, I = x.shape
    H = w_ih_t.shape[1]
    O = w_fc_t.shape[1]

    # Minimal sublane alignment only (pads <= 7 rows; no-op when B % 8 == 0).
    B_pad = _round_up(B, 8)
    if B_pad != B:
        x = jnp.pad(x, ((0, B_pad - B), (0, 0)))

    # Row tile: multiple of 16 (full packed vregs after the in-kernel bf16 cast),
    # capped at ~half the batch so the "parallel" axis has >= 2 steps (v7x: 2 TCs),
    # never larger than the aligned batch. Boundary blocks are masked by Pallas, so
    # there is no large jnp.pad / garbage-row computation when tb doesn't divide B.
    tb = max(16, _round_up(block_b, 16))
    tb = min(tb, max(16, _round_up((B_pad + 1) // 2, 16)))
    tb = min(tb, B_pad)
    grid = (pl.cdiv(B_pad, tb),)

    # Advisory cost so XLA can overlap surrounding ops with the custom call.
    cost = pl.CostEstimate(
        flops=2 * B_pad * (I * H + H * O),
        transcendentals=B_pad * H,
        bytes_accessed=(B_pad * I * 4 + B_pad * O * 4
                        + (I * H + H * O) * 2 + (H + O) * 4),
    )

    # VMEM budget: double-buffered x / out tiles + resident weights (2 bufs each) +
    # biases, with 2x headroom; clamped to v7x's 64 MiB physical VMEM.
    vmem_bytes = (2 * tb * I * 4 + 2 * tb * O * 4
                  + 2 * (I * H + H * O) * 2 + 2 * (H + O) * 4)
    vmem_limit = int(min(64 * 1024 * 1024, max(8 * 1024 * 1024, 2 * vmem_bytes)))
    # TODO(synk): for very large H on v7x, add pipeline_mode=pl.Buffered(1) on the
    # constant-index weight specs (or K-tile with an f32 VMEM accumulator) to halve
    # resident-weight VMEM.

    out = pl.pallas_call(
        rnn_fused_kernel,
        out_shape=jax.ShapeDtypeStruct((B_pad, O), jnp.float32),
        grid=grid,
        in_specs=[
            pl.BlockSpec((tb, I), lambda i: (i, 0)),     # x tile (f32, double-buffered)
            pl.BlockSpec((I, H), lambda i: (0, 0)),      # resident W_ih^T (bf16)
            pl.BlockSpec((1, H), lambda i: (0, 0)),      # resident folded RNN bias (f32)
            pl.BlockSpec((H, O), lambda i: (0, 0)),      # resident W_fc^T (bf16)
            pl.BlockSpec((1, O), lambda i: (0, 0)),      # resident fc bias (f32)
        ],
        out_specs=pl.BlockSpec((tb, O), lambda i: (i, 0)),  # real width O: no 16x write pad
        compiler_params=pltpu.CompilerParams(
            dimension_semantics=("parallel",),           # batch axis shards across TCs
            vmem_limit_bytes=vmem_limit,
        ),
        cost_estimate=cost,
    )(x, w_ih_t, bias_h, w_fc_t, b_fc_row)

    return out if B_pad == B else out[:B]


def reference_forward(x, w_ih, b_ih, w_hh, b_hh, w_fc, b_fc):
    h0 = jnp.zeros((x.shape[0], w_ih.shape[0]), jnp.float32)
    h1 = jnp.tanh(x @ w_ih.T + b_ih + h0 @ w_hh.T + b_hh)
    return jnp.maximum(h1, 0.0) @ w_fc.T + b_fc


if __name__ == "__main__":
    key = jax.random.PRNGKey(0)
    B, input_size, hidden_size, output_size = 4, 16, 32, 8

    ks = jax.random.split(key, 8)
    # Deterministic synthetic params (shapes match nn.RNN / nn.Linear).
    bound_rnn = 1.0 / jnp.sqrt(hidden_size)
    w_ih = jax.random.uniform(ks[0], (hidden_size, input_size), jnp.float32,
                              -bound_rnn, bound_rnn)
    w_hh = jax.random.uniform(ks[1], (hidden_size, hidden_size), jnp.float32,
                              -bound_rnn, bound_rnn)
    b_ih = jax.random.uniform(ks[2], (hidden_size,), jnp.float32,
                              -bound_rnn, bound_rnn)
    b_hh = jax.random.uniform(ks[3], (hidden_size,), jnp.float32,
                              -bound_rnn, bound_rnn)
    bound_fc = 1.0 / jnp.sqrt(hidden_size)
    w_fc = jax.random.uniform(ks[4], (output_size, hidden_size), jnp.float32,
                              -bound_fc, bound_fc)
    b_fc = jax.random.uniform(ks[5], (output_size,), jnp.float32,
                              -bound_fc, bound_fc)

    x = jax.random.normal(ks[6], (B, input_size), jnp.float32)

    params = prepare_params(w_ih, b_ih, w_hh, b_hh, w_fc, b_fc)   # one-time weight prep
    out = rnn_forward(x, params)
    out = jax.block_until_ready(out)

    ref = reference_forward(x, w_ih, b_ih, w_hh, b_hh, w_fc, b_fc)
    assert out.shape == (B, output_size)
    # bf16 MXU inputs (f32 accumulate) -> loosened tolerance vs. the pure-f32 reference.
    assert jnp.allclose(out, ref, atol=2e-2, rtol=2e-2), "mismatch vs JAX reference"
    print("KERNEL_OK")
</pallas_src>

<mosaic_0001>
module attributes {stable_mosaic.version = 11 : i64} {
  func.func @rnn_fused_kernel(%arg0: i32, %arg1: memref<8x16xf32, #tpu.memory_space<vmem>>, %arg2: memref<16x32xbf16, #tpu.memory_space<vmem>>, %arg3: memref<1x32xf32, #tpu.memory_space<vmem>>, %arg4: memref<32x8xbf16, #tpu.memory_space<vmem>>, %arg5: memref<1x8xf32, #tpu.memory_space<vmem>>, %arg6: memref<8x8xf32, #tpu.memory_space<vmem>>) attributes {dimension_semantics = [#tpu.dimension_semantics<parallel>], iteration_bounds = array<i64: 1>, scalar_prefetch = 0 : i64, scratch_operands = 0 : i64, tpu.core_type = #tpu.core_type<tc>, window_params = [{transform_indices = @transform_0, window_bounds = array<i64: 8, 16>}, {pipeline_mode = #tpu.pipeline_mode<synchronous>, transform_indices = @transform_1, window_bounds = array<i64: 16, 32>}, {pipeline_mode = #tpu.pipeline_mode<synchronous>, transform_indices = @transform_2, window_bounds = array<i64: 1, 32>}, {pipeline_mode = #tpu.pipeline_mode<synchronous>, transform_indices = @transform_3, window_bounds = array<i64: 32, 8>}, {pipeline_mode = #tpu.pipeline_mode<synchronous>, transform_indices = @transform_4, window_bounds = array<i64: 1, 8>}, {transform_indices = @transform_5, window_bounds = array<i64: 8, 8>}]} {
    %c0 = arith.constant 0 : index
    %c0_0 = arith.constant 0 : index
    %0 = vector.load %arg1[%c0, %c0_0] : memref<8x16xf32, #tpu.memory_space<vmem>>, vector<8x16xf32>
    %1 = arith.truncf %0 : vector<8x16xf32> to vector<8x16xbf16>
    %c0_1 = arith.constant 0 : index
    %c0_2 = arith.constant 0 : index
    %2 = vector.load %arg2[%c0_1, %c0_2] : memref<16x32xbf16, #tpu.memory_space<vmem>>, vector<16x32xbf16>
    %cst = arith.constant dense<0.000000e+00> : vector<8x32xf32>
    %3 = tpu.matmul %1, %2, %cst {dimension_numbers = #tpu.dot_dimension_numbers<[1], [0], [0], [1], [0, 0, 1, 1], [], []>} : vector<8x16xbf16>, vector<16x32xbf16>, vector<8x32xf32> -> vector<8x32xf32>
    %c0_3 = arith.constant 0 : index
    %c0_4 = arith.constant 0 : index
    %4 = vector.load %arg3[%c0_3, %c0_4] : memref<1x32xf32, #tpu.memory_space<vmem>>, vector<1x32xf32>
    %5 = vector.broadcast %4 : vector<1x32xf32> to vector<8x32xf32>
    %6 = arith.addf %3, %5 : vector<8x32xf32>
    %7 = math.tanh %6 : vector<8x32xf32>
    %cst_5 = arith.constant 0.000000e+00 : f32
    %8 = vector.broadcast %cst_5 : f32 to vector<8x32xf32>
    %9 = arith.maximumf %7, %8 : vector<8x32xf32>
    %10 = arith.truncf %9 : vector<8x32xf32> to vector<8x32xbf16>
    %c0_6 = arith.constant 0 : index
    %c0_7 = arith.constant 0 : index
    %11 = vector.load %arg4[%c0_6, %c0_7] : memref<32x8xbf16, #tpu.memory_space<vmem>>, vector<32x8xbf16>
    %cst_8 = arith.constant dense<0.000000e+00> : vector<8x8xf32>
    %12 = tpu.matmul %10, %11, %cst_8 {dimension_numbers = #tpu.dot_dimension_numbers<[1], [0], [0], [1], [0, 0, 1, 1], [], []>} : vector<8x32xbf16>, vector<32x8xbf16>, vector<8x8xf32> -> vector<8x8xf32>
    %c0_9 = arith.constant 0 : index
    %c0_10 = arith.constant 0 : index
    %13 = vector.load %arg5[%c0_9, %c0_10] : memref<1x8xf32, #tpu.memory_space<vmem>>, vector<1x8xf32>
    %14 = vector.broadcast %13 : vector<1x8xf32> to vector<8x8xf32>
    %15 = arith.addf %12, %14 : vector<8x8xf32>
    %c0_11 = arith.constant 0 : index
    %c0_12 = arith.constant 0 : index
    %16 = vector.load %arg6[%c0_11, %c0_12] : memref<8x8xf32, #tpu.memory_space<vmem>>, vector<8x8xf32>
    tpu.vector_store %arg6[%c0_11, %c0_12], %15 {strides = array<i32>} : memref<8x8xf32, #tpu.memory_space<vmem>>, vector<8x8xf32>,
    return
  }
  func.func @transform_0(%arg0: i32) -> (i32, i32) {
    %c0_i32 = arith.constant 0 : i32
    %c0_i32_0 = arith.constant 0 : i32
    return %arg0, %c0_i32 : i32, i32
  }
  func.func @transform_1(%arg0: i32) -> (i32, i32) {
    %c0_i32 = arith.constant 0 : i32
    %c0_i32_0 = arith.constant 0 : i32
    %c0_i32_1 = arith.constant 0 : i32
    return %c0_i32, %c0_i32_0 : i32, i32
  }
  func.func @transform_2(%arg0: i32) -> (i32, i32) {
    %c0_i32 = arith.constant 0 : i32
    %c0_i32_0 = arith.constant 0 : i32
    %c0_i32_1 = arith.constant 0 : i32
    return %c0_i32, %c0_i32_0 : i32, i32
  }
  func.func @transform_3(%arg0: i32) -> (i32, i32) {
    %c0_i32 = arith.constant 0 : i32
    %c0_i32_0 = arith.constant 0 : i32
    %c0_i32_1 = arith.constant 0 : i32
    return %c0_i32, %c0_i32_0 : i32, i32
  }
  func.func @transform_4(%arg0: i32) -> (i32, i32) {
    %c0_i32 = arith.constant 0 : i32
    %c0_i32_0 = arith.constant 0 : i32
    %c0_i32_1 = arith.constant 0 : i32
    return %c0_i32, %c0_i32_0 : i32, i32
  }
  func.func @transform_5(%arg0: i32) -> (i32, i32) {
    %c0_i32 = arith.constant 0 : i32
    %c0_i32_0 = arith.constant 0 : i32
    return %arg0, %c0_i32 : i32, i32
  }
}

</mosaic_0001>

<llo_original>
// kernel: rnn_forward.1
$region0: #{rnn_forward.1}
  #allocation0 [shape = 'u32[]', space=smem, size = 0x4, offset = 0x4, fixed_abs, tag = 'smem constant byte address 0x4 - core index']
  #allocation1 [shape = 'u32[144,128]{1,0:T(1,128)}', space=vmem, size = 0x12000, scoped, tag = 'internal scratch']
  %s0 = inlined_call_operand.vmem [shape: f32[8,16], index: 0, kind: input, shape index: {}]
  %s1 = inlined_call_operand.vmem [shape: bf16[16,32], index: 1, kind: input, shape index: {}]
  %s2 = inlined_call_operand.vmem [shape: f32[1,32], index: 2, kind: input, shape index: {}]
  %s3 = inlined_call_operand.vmem [shape: bf16[32,8], index: 3, kind: input, shape index: {}]
  %s4 = inlined_call_operand.vmem [shape: f32[1,8], index: 4, kind: input, shape index: {}]
  %s5 = inlined_call_operand.vmem [shape: f32[8,8], index: 5, kind: output, shape index: {}]
  %s6 = sld [smem:[#allocation0]]
  $region30: #{rnn_forward.1} parent=0
    _
  %s8 = ssub.s32 1, %s6
  %s9 = scalar_select 0, %s8, %s6
  // Predicated region
  $region2: #{rnn_forward.1} parent=0 // pred_check
    _
  $region3: #{rnn_forward.1} parent=0 // pred_check_branch
    %11 = sbr.rel (0) target = $region5
  $region4: #{rnn_forward.1} parent=0 // pred_region
    _
  $region5: #{rnn_forward.1} parent=0 // pred_fallthru
    _
  // Predicated region
  $region6: #{rnn_forward.1} parent=0 // pred_check
    _
  $region7: #{rnn_forward.1} parent=0 // pred_check_branch
    %13 = sbr.rel (0) target = $region9
  $region8: #{rnn_forward.1} parent=0 // pred_region
    _
  $region9: #{rnn_forward.1} parent=0 // pred_fallthru
    _
  // Predicated region
  $region10: #{rnn_forward.1} parent=0 // pred_check
    _
  $region11: #{rnn_forward.1} parent=0 // pred_check_branch
    %15 = sbr.rel (0) target = $region13
  $region12: #{rnn_forward.1} parent=0 // pred_region
    _
  $region13: #{rnn_forward.1} parent=0 // pred_fallthru
    _
  // Predicated region
  $region14: #{rnn_forward.1} parent=0 // pred_check
    _
  $region15: #{rnn_forward.1} parent=0 // pred_check_branch
    %17 = sbr.rel (0) target = $region17
  $region16: #{rnn_forward.1} parent=0 // pred_region
    _
  $region17: #{rnn_forward.1} parent=0 // pred_fallthru
    _
  // Predicated region
  $region18: #{rnn_forward.1} parent=0 // pred_check
    _
  $region19: #{rnn_forward.1} parent=0 // pred_check_branch
    %19 = sbr.rel (0) target = $region21
  $region20: #{rnn_forward.1} parent=0 // pred_region
    _
  $region21: #{rnn_forward.1} parent=0 // pred_fallthru
    _
  %v21 = vld [vmem:[%s0] sm:$0xff]
  %v22 = vpack.c.bf16 %v21, %v21
  %v23 = vld [vmem:[%s1] sm:$0xf]
  %v24 = vld [vmem:[%s1 + $0x4] sm:$0xf]
  %v25 = vld [vmem:[%s2] sm:$0x1]
  %v27 = vlaneseq
  %v28 = vshrl.u32 %v27, 7
  %v29 = vsub.s32 0, %v28
  %v30 = vrot.slane %v25, %v29
  %v34 = vunpack.c.l.b16 %v23
  %v35 = vunpack.c.l.b16 %v24
  %v36 = vpack.c.b16 %v35, %v34
  %vm38 = vcmask 130048
  %v40 = vsel %vm38, %v22, 0
  %42 = vmatprep.subr.bf16.mxu0 0
  %43 = vmatpush1.bf16.msra.mxu0 %v36
  %44 = vmatprep.subr.bf16.mxu0 0
  %45 = vmatpush1.bf16.msra.mxu0 0
  %46 = vmatprep.subr.bf16.mxu0 0
  %47 = vmatpush1.bf16.msra.mxu0 0
  %48 = vmatprep.subr.bf16.mxu0 0
  %49 = vmatpush1.bf16.msra.mxu0 0
  %50 = vmatprep.subr.bf16.mxu0 0
  %51 = vmatpush1.bf16.msra.mxu0 0
  %52 = vmatprep.subr.bf16.mxu0 0
  %53 = vmatpush1.bf16.msra.mxu0 0
  %54 = vmatprep.subr.bf16.mxu0 0
  %55 = vmatpush1.bf16.msra.mxu0 0
  %56 = vmatprep.subr.bf16.mxu0 0
  %57 = vmatpush1.bf16.msra.mxu0 0
  %58 = vmatprep.subr.bf16.mxu0 0
  %59 = vmatpush1.bf16.msra.mxu0 0
  %60 = vmatprep.subr.bf16.mxu0 0
  %61 = vmatpush1.bf16.msra.mxu0 0
  %62 = vmatprep.subr.bf16.mxu0 0
  %63 = vmatpush1.bf16.msra.mxu0 0
  %64 = vmatprep.subr.bf16.mxu0 0
  %65 = vmatpush1.bf16.msra.mxu0 0
  %66 = vmatprep.subr.bf16.mxu0 0
  %67 = vmatpush1.bf16.msra.mxu0 0
  %68 = vmatprep.subr.bf16.mxu0 0
  %69 = vmatpush1.bf16.msra.mxu0 0
  %70 = vmatprep.subr.bf16.mxu0 0
  %71 = vmatpush1.bf16.msra.mxu0 0
  %72 = vmatprep.subr.bf16.mxu0 0
  %73 = vmatpush1.bf16.msra.mxu0 0
  %74 = vmatprep.mubr.bf16.mxu0 0
  %75 = vmatmul.mubr.bf16.gmra.mrb[0].mxu0 %v40
  %v76 = vpop.f32.mrb[0].mxu0
  %v77 = vadd.f32 %v30, %v76
  %v78 = vpop.f32.mrb[0].mxu0
  %v79 = vpop.f32.mrb[0].mxu0
  %v80 = vpop.f32.mrb[0].mxu0
  %81 = vdwg.mxu0
  %v82 = vtanh.pop %v77
  %v83 = vmax.f32 %v82, 0.0
  %v84 = vpack.c.bf16 %v83, %v83
  %v85 = vld [vmem:[%s3] sm:$0xf]
  %v86 = vld [vmem:[%s3 + $0x4] sm:$0xf]
  %v87 = vld [vmem:[%s3 + $0x8] sm:$0xf]
  %v88 = vld [vmem:[%s3 + $0xc] sm:$0xf]
  %v89 = vld [vmem:[%s4] sm:$0x1]
  %v91 = vlaneseq
  %v92 = vshrl.u32 %v91, 7
  %v93 = vsub.s32 0, %v92
  %v94 = vrot.slane %v89, %v93
  %v100 = vunpack.c.l.b16 %v85
  %v101 = vunpack.c.l.b16 %v86
  %v102 = vunpack.c.l.b16 %v87
  %v103 = vunpack.c.l.b16 %v88
  %v104 = vpack.c.b16 %v101, %v100
  %v105 = vpack.c.b16 %v103, %v102
  %vm108 = vcmask 261120
  %v110 = vsel %vm108, %v84, 0
  %112 = vmatprep.subr.bf16.mxu0 0
  %113 = vmatpush1.bf16.msra.mxu0 %v104
  %114 = vmatprep.subr.bf16.mxu0 0
  %115 = vmatpush1.bf16.msra.mxu0 %v105
  %116 = vmatprep.subr.bf16.mxu0 0
  %117 = vmatpush1.bf16.msra.mxu0 0
  %118 = vmatprep.subr.bf16.mxu0 0
  %119 = vmatpush1.bf16.msra.mxu0 0
  %120 = vmatprep.subr.bf16.mxu0 0
  %121 = vmatpush1.bf16.msra.mxu0 0
  %122 = vmatprep.subr.bf16.mxu0 0
  %123 = vmatpush1.bf16.msra.mxu0 0
  %124 = vmatprep.subr.bf16.mxu0 0
  %125 = vmatpush1.bf16.msra.mxu0 0
  %126 = vmatprep.subr.bf16.mxu0 0
  %127 = vmatpush1.bf16.msra.mxu0 0
  %128 = vmatprep.subr.bf16.mxu0 0
  %129 = vmatpush1.bf16.msra.mxu0 0
  %130 = vmatprep.subr.bf16.mxu0 0
  %131 = vmatpush1.bf16.msra.mxu0 0
  %132 = vmatprep.subr.bf16.mxu0 0
  %133 = vmatpush1.bf16.msra.mxu0 0
  %134 = vmatprep.subr.bf16.mxu0 0
  %135 = vmatpush1.bf16.msra.mxu0 0
  %136 = vmatprep.subr.bf16.mxu0 0
  %137 = vmatpush1.bf16.msra.mxu0 0
  %138 = vmatprep.subr.bf16.mxu0 0
  %139 = vmatpush1.bf16.msra.mxu0 0
  %140 = vmatprep.subr.bf16.mxu0 0
  %141 = vmatpush1.bf16.msra.mxu0 0
  %142 = vmatprep.subr.bf16.mxu0 0
  %143 = vmatpush1.bf16.msra.mxu0 0
  %144 = vmatprep.mubr.bf16.mxu0 0
  %145 = vmatmul.mubr.bf16.gmra.mrb[0].mxu0 %v110
  %v146 = vpop.f32.mrb[0].mxu0
  %v147 = vadd.f32 %v94, %v146
  %v148 = vpop.f32.mrb[0].mxu0
  %v149 = vpop.f32.mrb[0].mxu0
  %v150 = vpop.f32.mrb[0].mxu0
  %151 = vdwg.mxu0
  %vm152 = vcmask 64512
  %153 = vst.msk [vmem:[%s5] sm:$0xff] %vm152, %v147
  // Predicated region
  $region22: #{rnn_forward.1} parent=0 // pred_check
    _
  $region23: #{rnn_forward.1} parent=0 // pred_check_branch
    %155 = sbr.rel (0) target = $region25
  $region24: #{rnn_forward.1} parent=0 // pred_region
    _
  $region25: #{rnn_forward.1} parent=0 // pred_fallthru
    _
  // Predicated region
  $region26: #{rnn_forward.1} parent=0 // pred_check
    _
  $region27: #{rnn_forward.1} parent=0 // pred_check_branch
    %157 = sbr.rel (0) target = $region29
  $region28: #{rnn_forward.1} parent=0 // pred_region
    _
  $region29: #{rnn_forward.1} parent=0 // pred_fallthru
    _

</llo_original>
